<compile_context>
chip_gen: v6e
topology: v6e:2x2x1
jax: 0.10.0
libtpu: 0.0.40
codegen_flags: <defaults>
</compile_context>

<pallas_src>
import jax
import jax.numpy as jnp
from jax.experimental import pallas as pl
from jax.experimental.pallas import tpu as pltpu


def _frame_kernel(x_ref, o_ref):
    """One grid step: Bb input rows -> Bb (n+1)x(n+1) skew-symmetric matrices.

    x_ref : (Bb, n)          input slab
    o_ref : (Bb, n+1, n+1)   output matrices in their final tiled layout
    """
    x = x_ref[...]                               # (Bb, n)
    bb = x.shape[0]
    n1 = o_ref.shape[-1]
    dt = o_ref.dtype

    # Constant +/-0.5 masks (tiny: one (n1, n1) slab each), built from iota.
    i = jax.lax.broadcasted_iota(jnp.int32, (n1, n1), 0)
    j = jax.lax.broadcasted_iota(jnp.int32, (n1, n1), 1)
    csup = jnp.where(j == i + 1, 0.5, 0.0).astype(dt)    # A[i, i+1] slot
    csub = jnp.where(i == j + 1, -0.5, 0.0).astype(dt)   # A[i+1, i] slot

    # Column-indexed X vectors (length n+1 along lanes):
    #   x_sup[b, j] = X[b, j-1]  (value that lands on the superdiagonal in col j)
    #   x_sub[b, j] = X[b, j]    (value that lands on the subdiagonal in col j)
    zero_col = jnp.zeros((bb, 1), dtype=x.dtype)
    x_sup = jnp.concatenate([zero_col, x], axis=-1)       # (Bb, n1)
    x_sub = jnp.concatenate([x, zero_col], axis=-1)       # (Bb, n1)

    o_ref[...] = (x_sup[:, None, :] * csup[None, :, :]
                  + x_sub[:, None, :] * csub[None, :, :]).astype(dt)


def _cdiv(a: int, b: int) -> int:
    return -(-a // b)


def _round_up(a: int, b: int) -> int:
    return _cdiv(a, b) * b


def _choose_block(B: int, block_b: int) -> int:
    """Per-step batch size Bb.

    Goals: multiple of 8 (or == B), divides B when possible (no pad/slice),
    >= 2 grid steps when cheap (v7x megacore), minimal padding otherwise.
    """
    if B <= block_b:
        if B >= 16 and B % 16 == 0:
            return B // 2          # two parallel steps -> both v7x TCs get work
        return B                   # single full block (block dim == array dim)
    g = _cdiv(B, block_b)          # number of grid steps
    return _round_up(_cdiv(B, g), 8)


def unitary_diag_frame(X, *, block_b: int = 1024):
    """JAX/Pallas equivalent of unitary_diag.forward for real inputs."""
    if X.ndim < 2:
        raise ValueError("weights has dimension < 2")
    if X.ndim != 3:
        raise ValueError("expected input of shape (M, C, n)")
    M, C, n = X.shape
    n1 = n + 1
    B = M * C
    dtype = X.dtype
    itemsize = jnp.dtype(dtype).itemsize

    # Padded per-batch-element footprint (VMEM & HBM): output tile pads the
    # minor two dims to (8,128) tiling; input pads n to 128 lanes.
    sub_pad = _round_up(n1, 8)
    lane_pad = _round_up(n1, 128)
    in_lane_pad = _round_up(n, 128)
    per_b_bytes = 2 * (sub_pad * lane_pad + in_lane_pad) * itemsize  # double-buffered

    # Cap the block so the double-buffered working set stays within a safe
    # scoped-VMEM budget on every generation (v7x physical is 64 MiB).
    vmem_budget = 40 << 20
    bb_cap = max(8, (vmem_budget // per_b_bytes) // 8 * 8)
    block_b = int(min(block_b, bb_cap))

    Bb = _choose_block(B, block_b)
    grid_b = _cdiv(B, Bb)
    B_pad = grid_b * Bb

    xf = X.reshape(B, n)
    if B_pad != B:
        # Fallback only when no multiple-of-8 block divides B; padding is at
        # most 7 + (grid_b - 1) extra rows here, negligible.
        xf = jnp.pad(xf, ((0, B_pad - B), (0, 0)))

    vmem_limit = int(min(48 << 20, max(32 << 20, Bb * per_b_bytes + (8 << 20))))

    out = pl.pallas_call(
        _frame_kernel,
        out_shape=jax.ShapeDtypeStruct((B_pad, n1, n1), dtype),
        grid=(grid_b,),
        in_specs=[pl.BlockSpec((Bb, n), lambda b: (b, 0))],
        out_specs=pl.BlockSpec((Bb, n1, n1), lambda b: (b, 0, 0)),
        compiler_params=pltpu.CompilerParams(
            dimension_semantics=("parallel",),
            vmem_limit_bytes=vmem_limit,
        ),
        cost_estimate=pl.CostEstimate(
            flops=4 * B_pad * n1 * n1,
            transcendentals=0,
            # Padded traffic actually moved: tiled output write + lane-padded input read.
            bytes_accessed=B_pad * (sub_pad * lane_pad + in_lane_pad) * itemsize,
        ),
    )(xf)

    if B_pad != B:
        out = out[:B]
    # (B, n+1, n+1) -> (M, C, n+1, n+1): only the leading dim is split; the
    # minor two (tiled) dims are untouched, so no relayout copy is required.
    return out.reshape(M, C, n1, n1)


def _reference_frame(X):
    """Pure-JAX reference mirroring the PyTorch code (real dtype)."""
    M, C, n = X.shape
    mat = jnp.zeros((M, C, n + 1, n + 1), X.dtype)
    idx = jnp.arange(n)
    mat = mat.at[:, :, idx, idx + 1].set(X)
    return (mat - jnp.swapaxes(mat, -2, -1)) / 2


if __name__ == "__main__":
    key = jax.random.PRNGKey(0)
    M, C, n = 2, 4, 16
    X = jax.random.normal(key, (M, C, n), dtype=jnp.float32)

    out = jax.block_until_ready(unitary_diag_frame(X))
    ref = _reference_frame(X)

    assert out.shape == (M, C, n + 1, n + 1)
    assert jnp.allclose(out, ref, atol=1e-6), "mismatch vs reference"
    # skew-symmetry check (in_lie_algebra for real dtype)
    assert jnp.allclose(jnp.swapaxes(out, -2, -1), -out, atol=1e-6)

    print("KERNEL_OK")
</pallas_src>

<mosaic_0001>
module attributes {stable_mosaic.version = 11 : i64} {
  func.func @_frame_kernel(%arg0: i32, %arg1: memref<8x16xf32, #tpu.memory_space<vmem>>, %arg2: memref<8x17x17xf32, #tpu.memory_space<vmem>>) attributes {dimension_semantics = [#tpu.dimension_semantics<parallel>], iteration_bounds = array<i64: 1>, scalar_prefetch = 0 : i64, scratch_operands = 0 : i64, tpu.core_type = #tpu.core_type<tc>, window_params = [{transform_indices = @transform_0, window_bounds = array<i64: 8, 16>}, {transform_indices = @transform_1, window_bounds = array<i64: 8, 17, 17>}]} {
    %c0 = arith.constant 0 : index
    %c0_0 = arith.constant 0 : index
    %0 = vector.load %arg1[%c0, %c0_0] : memref<8x16xf32, #tpu.memory_space<vmem>>, vector<8x16xf32>
    %1 = tpu.iota {dimensions = array<i32: 0>} : vector<17x17xi32>
    %2 = tpu.iota {dimensions = array<i32: 1>} : vector<17x17xi32>
    %c1_i32 = arith.constant 1 : i32
    %3 = vector.broadcast %c1_i32 : i32 to vector<17x17xi32>
    %4 = arith.addi %1, %3 : vector<17x17xi32>
    %5 = arith.cmpi eq, %2, %4 : vector<17x17xi32>
    %cst = arith.constant 5.000000e-01 : f32
    %cst_1 = arith.constant 0.000000e+00 : f32
    %6 = vector.broadcast %cst : f32 to vector<17x17xf32>
    %7 = vector.broadcast %cst_1 : f32 to vector<17x17xf32>
    %8 = arith.select %5, %6, %7 : vector<17x17xi1>, vector<17x17xf32>
    %c1_i32_2 = arith.constant 1 : i32
    %9 = vector.broadcast %c1_i32_2 : i32 to vector<17x17xi32>
    %10 = arith.addi %2, %9 : vector<17x17xi32>
    %11 = arith.cmpi eq, %1, %10 : vector<17x17xi32>
    %cst_3 = arith.constant -5.000000e-01 : f32
    %cst_4 = arith.constant 0.000000e+00 : f32
    %12 = vector.broadcast %cst_3 : f32 to vector<17x17xf32>
    %13 = vector.broadcast %cst_4 : f32 to vector<17x17xf32>
    %14 = arith.select %11, %12, %13 : vector<17x17xi1>, vector<17x17xf32>
    %cst_5 = arith.constant 0.000000e+00 : f32
    %15 = vector.broadcast %cst_5 : f32 to vector<8x1xf32>
    %16 = tpu.concatenate %15, %0 in 1 : vector<8x1xf32>, vector<8x16xf32> -> vector<8x17xf32>
    %17 = tpu.concatenate %0, %15 in 1 : vector<8x16xf32>, vector<8x1xf32> -> vector<8x17xf32>
    %18 = vector.shape_cast %16 : vector<8x17xf32> to vector<8x1x17xf32>
    %19 = vector.shape_cast %8 : vector<17x17xf32> to vector<1x17x17xf32>
    %20 = vector.broadcast %18 : vector<8x1x17xf32> to vector<8x17x17xf32>
    %21 = vector.broadcast %19 : vector<1x17x17xf32> to vector<8x17x17xf32>
    %22 = arith.mulf %20, %21 : vector<8x17x17xf32>
    %23 = vector.shape_cast %17 : vector<8x17xf32> to vector<8x1x17xf32>
    %24 = vector.shape_cast %14 : vector<17x17xf32> to vector<1x17x17xf32>
    %25 = vector.broadcast %23 : vector<8x1x17xf32> to vector<8x17x17xf32>
    %26 = vector.broadcast %24 : vector<1x17x17xf32> to vector<8x17x17xf32>
    %27 = arith.mulf %25, %26 : vector<8x17x17xf32>
    %28 = arith.addf %22, %27 : vector<8x17x17xf32>
    %c0_6 = arith.constant 0 : index
    %c0_7 = arith.constant 0 : index
    %c0_8 = arith.constant 0 : index
    %29 = vector.load %arg2[%c0_6, %c0_7, %c0_8] : memref<8x17x17xf32, #tpu.memory_space<vmem>>, vector<8x17x17xf32>
    tpu.vector_store %arg2[%c0_6, %c0_7, %c0_8], %28 {strides = array<i32>} : memref<8x17x17xf32, #tpu.memory_space<vmem>>, vector<8x17x17xf32>,
    return
  }
  func.func @transform_0(%arg0: i32) -> (i32, i32) {
    %c0_i32 = arith.constant 0 : i32
    %c0_i32_0 = arith.constant 0 : i32
    return %arg0, %c0_i32 : i32, i32
  }
  func.func @transform_1(%arg0: i32) -> (i32, i32, i32) {
    %c0_i32 = arith.constant 0 : i32
    %c0_i32_0 = arith.constant 0 : i32
    %c0_i32_1 = arith.constant 0 : i32
    return %arg0, %c0_i32, %c0_i32_0 : i32, i32, i32
  }
}

</mosaic_0001>

<llo_original>
// kernel: tpu_custom_call.1
$region0: #{tpu_custom_call.1}
  #allocation0 [shape = 'u32[]', space=smem, size = 0x4, offset = 0x4, fixed_abs, tag = 'smem constant byte address 0x4 - core index']
  #allocation1 [shape = 'u32[144,128]{1,0:T(1,128)}', space=vmem, size = 0x12000, scoped, tag = 'internal scratch']
  %s0 = inlined_call_operand.hbm [shape: f32[8,16], index: 0, kind: input, shape index: {}]
  %s1 = inlined_call_operand.vmem [shape: f32[8,17,17], index: 1, kind: output, shape index: {}]
  %s2 = sld [smem:[#allocation0]]
  $region18: #{tpu_custom_call.1} parent=0
    _
  %s4 = ssub.s32 1, %s2
  %s5 = scalar_select 0, %s4, %s2
  $region1: #{tpu_custom_call.1} parent=0
    #allocation2 [shape = 'u8[4096]{0}', space=vmem, size = 0x1000, scoped, tag = 'input window, operand 0, single buffered']
    #allocation3 [shape = 's32[1]{0}', space=sflag, size = 0x4, scoped, tag = 'scoped memory for tpu_custom_call.1']
    %6 = vsyncpa [#allocation3], 0
    // Predicated region
    $region2: #{tpu_custom_call.1} parent=1 // pred_check
      _
    $region3: #{tpu_custom_call.1} parent=1 // pred_check_branch
      %8 = sbr.rel (0) target = $region5
    $region4: #{tpu_custom_call.1} parent=1 // pred_region
      %s10 = ssub.s32 128, 128
      %11 = vsyncadd [#allocation3], %s10
      %s13 = sshll.u32 [#allocation2], 4
      %s14 = int_to_ptr.vmem [resolvable:$true] %s13
      %16 = dma.hbm_to_vmem [thread:$0]  %s0, 128, %s14, [#allocation3]
    $region5: #{tpu_custom_call.1} parent=1 // pred_fallthru
      _
    // Predicated region
    $region6: #{tpu_custom_call.1} parent=1 // pred_check
      _
    $region7: #{tpu_custom_call.1} parent=1 // pred_check_branch
      %18 = sbr.rel (0) target = $region9
    $region8: #{tpu_custom_call.1} parent=1 // pred_region
      %19 = dma.done [#allocation3], 128
    $region9: #{tpu_custom_call.1} parent=1 // pred_fallthru
      _
    %v20 = vld [vmem:[#allocation2] sm:$0xff]
    %v21 = vlaneseq
    %v22 = vshrl.u32 %v21, 7
    %v23 = vadd.s32 %v22, 8
    %v24 = vadd.s32 %v22, 16
    %v25 = vlaneseq
    %v26 = vand.u32 %v25, 127
    %v27 = vadd.s32 %v22, 1
    %v28 = vadd.s32 %v23, 1
    %v29 = vadd.s32 %v24, 1
    %vm30 = vcmp.eq.s32.totalorder %v26, %v27
    %vm31 = vcmp.eq.s32.totalorder %v26, %v28
    %vm32 = vcmp.eq.s32.totalorder %v26, %v29
    %v33 = vsel %vm30, 0.5, 0.0
    %v34 = vsel %vm31, 0.5, 0.0
    %v35 = vsel %vm32, 0.5, 0.0
    %v36 = vadd.s32 %v26, 1
    %vm37 = vcmp.eq.s32.totalorder %v22, %v36
    %vm38 = vcmp.eq.s32.totalorder %v23, %v36
    %vm39 = vcmp.eq.s32.totalorder %v24, %v36
    %v40 = vsel %vm37, -0.5, 0.0
    %v41 = vsel %vm38, -0.5, 0.0
    %v42 = vsel %vm39, -0.5, 0.0
    %44 = vrot.lane.b32.xlu0 %v20, 1
    %v45 = vpop.permute.xlu0 %44
    %vm47 = vcmask 7168
    %v48 = vsel %vm47, 0.0, %v45
    %vm49 = vcmask 130048
    %v50 = vsel %vm49, %v20, 0.0
    %v52 = vcombine.high %v48, %v48
    %v54 = vunpack.c.l.s4 1966171168
    %v55 = vunpack.c.0.s8 %v54
    %v56 = vlaneseq
    %v57 = vshrl.u32 %v56, 7
    %v58 = vsub.s32 %v55, %v57
    %v59 = vrot.slane %v48, %v58
    %v61 = vunpack.c.l.s4 1966171168
    %v62 = vunpack.c.0.s8 %v61
    %v63 = vlaneseq
    %v64 = vshrl.u32 %v63, 7
    %v65 = vsub.s32 %v62, %v64
    %v66 = vrot.slane %v52, %v65
    %v67 = vcombine.high %v59, %v59
    %v68 = vcombine.high %v66, %v66
    %v70 = vunpack.c.l.s4 1966171168
    %v71 = vunpack.c.0.s8 %v70
    %v72 = vlaneseq
    %v73 = vshrl.u32 %v72, 7
    %v74 = vsub.s32 %v71, %v73
    %v75 = vrot.slane %v59, %v74
    %v77 = vunpack.c.l.s4 1966171168
    %v78 = vunpack.c.0.s8 %v77
    %v79 = vlaneseq
    %v80 = vshrl.u32 %v79, 7
    %v81 = vsub.s32 %v78, %v80
    %v82 = vrot.slane %v66, %v81
    %v84 = vunpack.c.l.s4 1966171168
    %v85 = vunpack.c.0.s8 %v84
    %v86 = vlaneseq
    %v87 = vshrl.u32 %v86, 7
    %v88 = vsub.s32 %v85, %v87
    %v89 = vrot.slane %v67, %v88
    %v91 = vunpack.c.l.s4 1966171168
    %v92 = vunpack.c.0.s8 %v91
    %v93 = vlaneseq
    %v94 = vshrl.u32 %v93, 7
    %v95 = vsub.s32 %v92, %v94
    %v96 = vrot.slane %v68, %v95
    %v97 = vcombine.high %v75, %v75
    %v98 = vcombine.high %v82, %v82
    %v99 = vcombine.high %v89, %v89
    %v100 = vcombine.high %v96, %v96
    %v101 = vlaneseq
    %v102 = vshrl.u32 %v101, 7
    %v103 = vsub.s32 0, %v102
    %v104 = vrot.slane %v75, %v103
    %v105 = vlaneseq
    %v106 = vshrl.u32 %v105, 7
    %v107 = vsub.s32 0, %v106
    %v108 = vrot.slane %v89, %v107
    %v109 = vlaneseq
    %v110 = vshrl.u32 %v109, 7
    %v111 = vsub.s32 0, %v110
    %v112 = vrot.slane %v97, %v111
    %v113 = vlaneseq
    %v114 = vshrl.u32 %v113, 7
    %v115 = vsub.s32 0, %v114
    %v116 = vrot.slane %v99, %v115
    %v117 = vlaneseq
    %v118 = vshrl.u32 %v117, 7
    %v119 = vsub.s32 0, %v118
    %v120 = vrot.slane %v82, %v119
    %v121 = vlaneseq
    %v122 = vshrl.u32 %v121, 7
    %v123 = vsub.s32 0, %v122
    %v124 = vrot.slane %v96, %v123
    %v125 = vlaneseq
    %v126 = vshrl.u32 %v125, 7
    %v127 = vsub.s32 0, %v126
    %v128 = vrot.slane %v98, %v127
    %v129 = vlaneseq
    %v130 = vshrl.u32 %v129, 7
    %v131 = vsub.s32 0, %v130
    %v132 = vrot.slane %v100, %v131
    %v141 = vmul.f32 %v104, %v33
    %v142 = vmul.f32 %v104, %v34
    %v143 = vmul.f32 %v104, %v35
    %v144 = vmul.f32 %v108, %v33
    %v145 = vmul.f32 %v108, %v34
    %v146 = vmul.f32 %v108, %v35
    %v147 = vmul.f32 %v112, %v33
    %v148 = vmul.f32 %v112, %v34
    %v149 = vmul.f32 %v112, %v35
    %v150 = vmul.f32 %v116, %v33
    %v151 = vmul.f32 %v116, %v34
    %v152 = vmul.f32 %v116, %v35
    %v153 = vmul.f32 %v120, %v33
    %v154 = vmul.f32 %v120, %v34
    %v155 = vmul.f32 %v120, %v35
    %v156 = vmul.f32 %v124, %v33
    %v157 = vmul.f32 %v124, %v34
    %v158 = vmul.f32 %v124, %v35
    %v159 = vmul.f32 %v128, %v33
    %v160 = vmul.f32 %v128, %v34
    %v161 = vmul.f32 %v128, %v35
    %v162 = vmul.f32 %v132, %v33
    %v163 = vmul.f32 %v132, %v34
    %v164 = vmul.f32 %v132, %v35
    %v166 = vcombine.high %v50, %v50
    %v168 = vunpack.c.l.s4 1966171168
    %v169 = vunpack.c.0.s8 %v168
    %v170 = vlaneseq
    %v171 = vshrl.u32 %v170, 7
    %v172 = vsub.s32 %v169, %v171
    %v173 = vrot.slane %v50, %v172
    %v175 = vunpack.c.l.s4 1966171168
    %v176 = vunpack.c.0.s8 %v175
    %v177 = vlaneseq
    %v178 = vshrl.u32 %v177, 7
    %v179 = vsub.s32 %v176, %v178
    %v180 = vrot.slane %v166, %v179
    %v181 = vcombine.high %v173, %v173
    %v182 = vcombine.high %v180, %v180
    %v184 = vunpack.c.l.s4 1966171168
    %v185 = vunpack.c.0.s8 %v184
    %v186 = vlaneseq
    %v187 = vshrl.u32 %v186, 7
    %v188 = vsub.s32 %v185, %v187
    %v189 = vrot.slane %v173, %v188
    %v191 = vunpack.c.l.s4 1966171168
    %v192 = vunpack.c.0.s8 %v191
    %v193 = vlaneseq
    %v194 = vshrl.u32 %v193, 7
    %v195 = vsub.s32 %v192, %v194
    %v196 = vrot.slane %v180, %v195
    %v198 = vunpack.c.l.s4 1966171168
    %v199 = vunpack.c.0.s8 %v198
    %v200 = vlaneseq
    %v201 = vshrl.u32 %v200, 7
    %v202 = vsub.s32 %v199, %v201
    %v203 = vrot.slane %v181, %v202
    %v205 = vunpack.c.l.s4 1966171168
    %v206 = vunpack.c.0.s8 %v205
    %v207 = vlaneseq
    %v208 = vshrl.u32 %v207, 7
    %v209 = vsub.s32 %v206, %v208
    %v210 = vrot.slane %v182, %v209
    %v211 = vcombine.high %v189, %v189
    %v212 = vcombine.high %v196, %v196
    %v213 = vcombine.high %v203, %v203
    %v214 = vcombine.high %v210, %v210
    %v215 = vlaneseq
    %v216 = vshrl.u32 %v215, 7
    %v217 = vsub.s32 0, %v216
    %v218 = vrot.slane %v189, %v217
    %v219 = vlaneseq
    %v220 = vshrl.u32 %v219, 7
    %v221 = vsub.s32 0, %v220
    %v222 = vrot.slane %v203, %v221
    %v223 = vlaneseq
    %v224 = vshrl.u32 %v223, 7
    %v225 = vsub.s32 0, %v224
    %v226 = vrot.slane %v211, %v225
    %v227 = vlaneseq
    %v228 = vshrl.u32 %v227, 7
    %v229 = vsub.s32 0, %v228
    %v230 = vrot.slane %v213, %v229
    %v231 = vlaneseq
    %v232 = vshrl.u32 %v231, 7
    %v233 = vsub.s32 0, %v232
    %v234 = vrot.slane %v196, %v233
    %v235 = vlaneseq
    %v236 = vshrl.u32 %v235, 7
    %v237 = vsub.s32 0, %v236
    %v238 = vrot.slane %v210, %v237
    %v239 = vlaneseq
    %v240 = vshrl.u32 %v239, 7
    %v241 = vsub.s32 0, %v240
    %v242 = vrot.slane %v212, %v241
    %v243 = vlaneseq
    %v244 = vshrl.u32 %v243, 7
    %v245 = vsub.s32 0, %v244
    %v246 = vrot.slane %v214, %v245
    %v255 = vmul.f32 %v218, %v40
    %v256 = vmul.f32 %v218, %v41
    %v257 = vmul.f32 %v218, %v42
    %v258 = vmul.f32 %v222, %v40
    %v259 = vmul.f32 %v222, %v41
    %v260 = vmul.f32 %v222, %v42
    %v261 = vmul.f32 %v226, %v40
    %v262 = vmul.f32 %v226, %v41
    %v263 = vmul.f32 %v226, %v42
    %v264 = vmul.f32 %v230, %v40
    %v265 = vmul.f32 %v230, %v41
    %v266 = vmul.f32 %v230, %v42
    %v267 = vmul.f32 %v234, %v40
    %v268 = vmul.f32 %v234, %v41
    %v269 = vmul.f32 %v234, %v42
    %v270 = vmul.f32 %v238, %v40
    %v271 = vmul.f32 %v238, %v41
    %v272 = vmul.f32 %v238, %v42
    %v273 = vmul.f32 %v242, %v40
    %v274 = vmul.f32 %v242, %v41
    %v275 = vmul.f32 %v242, %v42
    %v276 = vmul.f32 %v246, %v40
    %v277 = vmul.f32 %v246, %v41
    %v278 = vmul.f32 %v246, %v42
    %v279 = vadd.f32 %v141, %v255
    %v280 = vadd.f32 %v142, %v256
    %v281 = vadd.f32 %v143, %v257
    %v282 = vadd.f32 %v144, %v258
    %v283 = vadd.f32 %v145, %v259
    %v284 = vadd.f32 %v146, %v260
    %v285 = vadd.f32 %v147, %v261
    %v286 = vadd.f32 %v148, %v262
    %v287 = vadd.f32 %v149, %v263
    %v288 = vadd.f32 %v150, %v264
    %v289 = vadd.f32 %v151, %v265
    %v290 = vadd.f32 %v152, %v266
    %v291 = vadd.f32 %v153, %v267
    %v292 = vadd.f32 %v154, %v268
    %v293 = vadd.f32 %v155, %v269
    %v294 = vadd.f32 %v156, %v270
    %v295 = vadd.f32 %v157, %v271
    %v296 = vadd.f32 %v158, %v272
    %v297 = vadd.f32 %v159, %v273
    %v298 = vadd.f32 %v160, %v274
    %v299 = vadd.f32 %v161, %v275
    %v300 = vadd.f32 %v162, %v276
    %v301 = vadd.f32 %v163, %v277
    %v302 = vadd.f32 %v164, %v278
    %vm303 = vcmask 138240
    %304 = vst.msk [vmem:[%s1] sm:$0xff] %vm303, %v279
    %305 = vst.msk [vmem:[%s1 + $0x8] sm:$0xff] %vm303, %v280
    %vm306 = vcmask 131072
    %307 = vst.msk [vmem:[%s1 + $0x10] sm:$0x1] %vm306, %v281
    %308 = vst.msk [vmem:[%s1 + $0x18] sm:$0xff] %vm303, %v282
    %309 = vst.msk [vmem:[%s1 + $0x20] sm:$0xff] %vm303, %v283
    %310 = vst.msk [vmem:[%s1 + $0x28] sm:$0x1] %vm306, %v284
    %311 = vst.msk [vmem:[%s1 + $0x30] sm:$0xff] %vm303, %v285
    %312 = vst.msk [vmem:[%s1 + $0x38] sm:$0xff] %vm303, %v286
    %313 = vst.msk [vmem:[%s1 + $0x40] sm:$0x1] %vm306, %v287
    %314 = vst.msk [vmem:[%s1 + $0x48] sm:$0xff] %vm303, %v288
    %315 = vst.msk [vmem:[%s1 + $0x50] sm:$0xff] %vm303, %v289
    %316 = vst.msk [vmem:[%s1 + $0x58] sm:$0x1] %vm306, %v290
    %317 = vst.msk [vmem:[%s1 + $0x60] sm:$0xff] %vm303, %v291
    %318 = vst.msk [vmem:[%s1 + $0x68] sm:$0xff] %vm303, %v292
    %319 = vst.msk [vmem:[%s1 + $0x70] sm:$0x1] %vm306, %v293
    %320 = vst.msk [vmem:[%s1 + $0x78] sm:$0xff] %vm303, %v294
    %321 = vst.msk [vmem:[%s1 + $0x80] sm:$0xff] %vm303, %v295
    %322 = vst.msk [vmem:[%s1 + $0x88] sm:$0x1] %vm306, %v296
    %323 = vst.msk [vmem:[%s1 + $0x90] sm:$0xff] %vm303, %v297
    %324 = vst.msk [vmem:[%s1 + $0x98] sm:$0xff] %vm303, %v298
    %325 = vst.msk [vmem:[%s1 + $0xa0] sm:$0x1] %vm306, %v299
    %326 = vst.msk [vmem:[%s1 + $0xa8] sm:$0xff] %vm303, %v300
    %327 = vst.msk [vmem:[%s1 + $0xb0] sm:$0xff] %vm303, %v301
    %328 = vst.msk [vmem:[%s1 + $0xb8] sm:$0x1] %vm306, %v302
    // Predicated region
    $region10: #{tpu_custom_call.1} parent=1 // pred_check
      _
    $region11: #{tpu_custom_call.1} parent=1 // pred_check_branch
      %330 = sbr.rel (0) target = $region13
    $region12: #{tpu_custom_call.1} parent=1 // pred_region
      _
    $region13: #{tpu_custom_call.1} parent=1 // pred_fallthru
      _
    // Predicated region
    $region14: #{tpu_custom_call.1} parent=1 // pred_check
      _
    $region15: #{tpu_custom_call.1} parent=1 // pred_check_branch
      %332 = sbr.rel (0) target = $region17
    $region16: #{tpu_custom_call.1} parent=1 // pred_region
      _
    $region17: #{tpu_custom_call.1} parent=1 // pred_fallthru
      _
    %333 = vsyncpa [#allocation3], 1

</llo_original>
